<compile_context>
chip_gen: v7x
topology: tpu7x:2x2x1
jax: 0.10.0
libtpu: 0.0.40
codegen_flags: <defaults>
</compile_context>

<pallas_src>
import numpy as np
import jax
import jax.numpy as jnp
from jax.experimental import pallas as pl
from jax.experimental.pallas import tpu as pltpu


def build_params(key, M, P):
    """Deterministic synthetic parameters matching the PyTorch module shapes."""
    ks = jax.random.split(key, 12)
    sc = 0.1
    pt = {
        # nn.Linear(2P, M)
        "W_d_w": sc * jax.random.normal(ks[0], (M, 2 * P), jnp.float32),
        "W_d_b": sc * jax.random.normal(ks[1], (M,), jnp.float32),
        # nn.Linear(M, M, bias=False)
        "U_d_w": sc * jax.random.normal(ks[2], (M, M), jnp.float32),
        # nn.Linear(M+1, 1)
        "w_tilda_w": sc * jax.random.normal(ks[3], (1, M + 1), jnp.float32),
        "w_tilda_b": sc * jax.random.normal(ks[4], (1,), jnp.float32),
        # nn.Linear(P+M, P)
        "W_y_w": sc * jax.random.normal(ks[5], (P, P + M), jnp.float32),
        "W_y_b": sc * jax.random.normal(ks[6], (P,), jnp.float32),
        # nn.Linear(P, 1)
        "v_y_w": sc * jax.random.normal(ks[7], (1, P), jnp.float32),
        "v_y_b": sc * jax.random.normal(ks[8], (1,), jnp.float32),
        # nn.LSTMCell(1, P): gate order i, f, g, o
        "w_ih": sc * jax.random.normal(ks[9], (4 * P, 1), jnp.float32),
        "w_hh": sc * jax.random.normal(ks[10], (4 * P, P), jnp.float32),
        "b_ih": sc * jax.random.normal(ks[11], (4 * P,), jnp.float32),
        "b_hh": jnp.zeros((4 * P,), jnp.float32),
        # NOTE: self.v_d exists in __init__ but is unused in forward -> omitted.
        # NOTE: W_d / U_d only feed the (mathematically dead) attention logits;
        # they stay in the pure-JAX reference but are not given to the kernel.
    }
    return pt


def prep_kernel_params(pt, M, P):
    """Pack PyTorch-convention weights into two 128-lane-dense f32 slabs."""
    # ---- LSTM slab: (P + 2, 4P) ------------------------------------------
    #   rows 0..P-1 : whh = w_hh.T          (P, 4P)
    #   row  P      : wih = w_ih[:, 0]      (1, 4P)
    #   row  P+1    : b_lstm = b_ih + b_hh  (1, 4P)
    whh = pt["w_hh"].T
    wih = pt["w_ih"][:, 0].reshape(1, 4 * P)
    b_l = (pt["b_ih"] + pt["b_hh"]).reshape(1, 4 * P)
    lstm_slab = jnp.concatenate([whh, wih, b_l], axis=0).astype(jnp.float32)

    # ---- projection / misc slab: (P + 1, 4P) -----------------------------
    #   rows 0..P-1, cols 0..P-1   : Wyd = W_y_w[:, :P].T   (P, P)
    #   rows 0..M-1, cols P..2P-1  : Wyc = W_y_w[:, P:].T   (M, P)
    #   row  P:
    #     cols 0..P-1              : by  = W_y_b            (1, P)
    #     cols P..2P-1             : vy  = v_y_w             (1, P)
    #     cols 2P..2P+M-1          : wtc = w_tilda_w[0,:M]   (1, M)
    #     col  2P+M                : wty = w_tilda_w[0, M]
    #     col  2P+M+1              : bt  = w_tilda_b
    #     col  2P+M+2              : bvy = v_y_b
    assert 2 * P + M + 3 <= 4 * P
    Wyd = pt["W_y_w"][:, :P].T
    Wyc = pt["W_y_w"][:, P:].T
    misc = jnp.concatenate(
        [pt["W_y_b"].reshape(1, P),
         pt["v_y_w"].reshape(1, P),
         pt["w_tilda_w"][0, :M].reshape(1, M),
         pt["w_tilda_w"][0, M:].reshape(1, 1),
         pt["w_tilda_b"].reshape(1, 1),
         pt["v_y_b"].reshape(1, 1)], axis=1)
    proj_slab = jnp.zeros((P + 1, 4 * P), jnp.float32)
    proj_slab = proj_slab.at[0:P, 0:P].set(Wyd)
    proj_slab = proj_slab.at[0:M, P:2 * P].set(Wyc)
    proj_slab = proj_slab.at[P:P + 1, 0:2 * P + M + 3].set(misc)
    return lstm_slab, proj_slab


def temporal_decoder_pallas(enc, y2d, kparams, T):
    B, Tenc, M = enc.shape
    lstm_slab, proj_slab = kparams
    P = lstm_slab.shape[1] // 4
    inv_tenc = 1.0 / float(Tenc)            # Python float -> trace-time literal

    # Fill sublanes: pad batch to a multiple of 8 (zero rows are harmless:
    # every op on them stays finite and they are sliced off afterwards).
    Bp = ((B + 7) // 8) * 8
    enc_p = jnp.zeros((Bp, Tenc, M), jnp.float32).at[:B].set(enc)
    y_tb = jnp.zeros((T, Bp), jnp.float32).at[:, :B].set(y2d.T)   # (T, Bp)

    def kernel(enc_ref, y_ref, lstm_ref, proj_ref, out_ref):
        enc_v = enc_ref[...]                                     # (Bp, Tenc, M)

        # --- temporal attention, hoisted (exactly uniform, see header) -----
        c_t = jnp.sum(enc_v, axis=1) * inv_tenc                  # (Bp, M)

        # --- carve the packed parameter slabs (one-time, outside the loop) -
        lstm = lstm_ref[...]                                     # (P+2, 4P)
        whh = lstm[0:P, :]                                       # (P, 4P)
        wih = lstm[P:P + 1, :]                                   # (1, 4P)
        b_l = lstm[P + 1:P + 2, :]                               # (1, 4P)

        proj = proj_ref[...]                                     # (P+1, 4P)
        Wyd = proj[0:P, 0:P]                                     # (P, P)
        Wyc = proj[0:M, P:2 * P]                                 # (M, P)
        misc = proj[P:P + 1, :]                                  # (1, 4P)
        by = misc[:, 0:P]                                        # (1, P)
        vy_row = misc[:, P:2 * P]                                # (1, P)
        wtc_row = misc[:, 2 * P:2 * P + M]                       # (1, M)
        wty = misc[:, 2 * P + M:2 * P + M + 1]                   # (1, 1)
        bt = misc[:, 2 * P + M + 1:2 * P + M + 2]                # (1, 1)
        bvy = misc[:, 2 * P + M + 2:2 * P + M + 3]               # (1, 1)

        # --- w_tilda(cat(c_t, y_t)) for all t, VPU style --------------------
        c_wt = jnp.sum(c_t * wtc_row, axis=-1, keepdims=True) + bt   # (Bp, 1)
        y_tilda = c_wt[None, :, :] + y_tb_mul(y_ref[...], wty)       # (T, Bp, 1)

        # Hoisted per-step input contribution of the LSTM gates: (T, Bp, 4P).
        pre_y = y_tilda * wih[None, :, :] + b_l[None, :, :]

        # Loop-invariant half of the final W_y projection.
        proj_c = (jnp.dot(c_t, Wyc, preferred_element_type=jnp.float32)
                  + by)                                              # (Bp, P)

        # --- LSTMCell(input=1, hidden=P), fused gates, unrolled over T ------
        d = jnp.zeros((Bp, P), jnp.float32)
        s = jnp.zeros((Bp, P), jnp.float32)
        for t in range(T):
            pre = pre_y[t] + jnp.dot(d, whh,
                                     preferred_element_type=jnp.float32)
            sig = jax.nn.sigmoid(pre)      # one full-width EUP pass
            th = jnp.tanh(pre)             # one full-width EUP pass
            i_g = sig[:, 0:P]
            f_g = sig[:, P:2 * P]
            g_g = th[:, 2 * P:3 * P]
            o_g = sig[:, 3 * P:4 * P]
            s = f_g * s + i_g * g_g
            d = o_g * jnp.tanh(s)

        # --- final projection: v_y(W_y(cat(d, c_t))), v_y done on the VPU ---
        dc = (jnp.dot(d, Wyd, preferred_element_type=jnp.float32)
              + proj_c)                                              # (Bp, P)
        out_ref[...] = (jnp.sum(dc * vy_row, axis=-1, keepdims=True)
                        + bvy)                                       # (Bp, 1)

    def y_tb_mul(y_v, wty):
        # (T, Bp) * scalar-weight -> (T, Bp, 1)
        return y_v[:, :, None] * wty[None, :, :]

    out = pl.pallas_call(
        kernel,
        out_shape=jax.ShapeDtypeStruct((Bp, 1), jnp.float32),
        in_specs=[pl.BlockSpec(memory_space=pltpu.MemorySpace.VMEM)
                  for _ in range(4)],
        out_specs=pl.BlockSpec(memory_space=pltpu.MemorySpace.VMEM),
    )(enc_p, y_tb, lstm_slab, proj_slab)
    return out[:B]


def temporal_decoder_ref(enc, y2d, pt, M, P, T):
    """Pure-JAX reference mirroring the PyTorch forward exactly."""
    B, Tenc, _ = enc.shape
    d = jnp.zeros((B, P), jnp.float32)
    s = jnp.zeros((B, P), jnp.float32)
    c_t = jnp.zeros((B, M), jnp.float32)
    for t in range(T):
        ds = jnp.concatenate([d, s], axis=1)
        x1 = ds @ pt["W_d_w"].T + pt["W_d_b"]                 # (B, M)
        x1r = jnp.repeat(x1[:, None, :], Tenc, axis=1)        # (B, Tenc, M)
        y1 = enc @ pt["U_d_w"].T                              # (B, Tenc, M)
        l = jnp.sum(jnp.matmul(x1r, jnp.transpose(y1, (0, 2, 1))), axis=-1)
        beta = jax.nn.softmax(l, axis=1)[:, :, None]
        c_t = jnp.sum(beta * enc, axis=1)
        yc = jnp.concatenate([c_t, y2d[:, t:t + 1]], axis=1)
        y_tilda = yc @ pt["w_tilda_w"].T + pt["w_tilda_b"]    # (B, 1)
        gates = (y_tilda @ pt["w_ih"].T + pt["b_ih"]
                 + d @ pt["w_hh"].T + pt["b_hh"])
        i_g, f_g, g_g, o_g = jnp.split(gates, 4, axis=1)
        i_g, f_g, o_g = jax.nn.sigmoid(i_g), jax.nn.sigmoid(f_g), jax.nn.sigmoid(o_g)
        g_g = jnp.tanh(g_g)
        s = f_g * s + i_g * g_g
        d = o_g * jnp.tanh(s)
    dc = jnp.concatenate([d, c_t], axis=1)
    return (dc @ pt["W_y_w"].T + pt["W_y_b"]) @ pt["v_y_w"].T + pt["v_y_b"]


if __name__ == "__main__":
    # Small shapes consistent with the module: M encoder feature dim,
    # P decoder hidden dim, T decoding steps, Tenc encoder timesteps.
    B, M, P, T, Tenc = 4, 16, 32, 6, 8

    key = jax.random.PRNGKey(0)
    k_enc, k_y, k_par = jax.random.split(key, 3)
    encoded_inputs = jax.random.normal(k_enc, (B, Tenc, M), jnp.float32)
    y = jax.random.normal(k_y, (B, T, 1), jnp.float32)
    y2d = y[:, :, 0]                                          # (B, T)

    pt = build_params(k_par, M, P)
    kparams = prep_kernel_params(pt, M, P)

    out = temporal_decoder_pallas(encoded_inputs, y2d, kparams, T)
    out = jax.block_until_ready(out)

    ref = temporal_decoder_ref(encoded_inputs, y2d, pt, M, P, T)
    np.testing.assert_allclose(np.asarray(out), np.asarray(ref),
                               rtol=2e-4, atol=2e-4)
    print("KERNEL_OK")
</pallas_src>

<mosaic_0001>
module attributes {stable_mosaic.version = 11 : i64} {
  func.func @kernel(%arg0: memref<8x8x16xf32, #tpu.memory_space<vmem>>, %arg1: memref<6x8xf32, #tpu.memory_space<vmem>>, %arg2: memref<34x128xf32, #tpu.memory_space<vmem>>, %arg3: memref<33x128xf32, #tpu.memory_space<vmem>>, %arg4: memref<8x1xf32, #tpu.memory_space<vmem>>) attributes {dimension_semantics = [], scalar_prefetch = 0 : i64, scratch_operands = 0 : i64, tpu.core_type = #tpu.core_type<tc>} {
    %c0 = arith.constant 0 : index
    %c0_0 = arith.constant 0 : index
    %c0_1 = arith.constant 0 : index
    %0 = vector.load %arg0[%c0, %c0_0, %c0_1] : memref<8x8x16xf32, #tpu.memory_space<vmem>>, vector<8x8x16xf32>
    %cst = arith.constant dense<0.000000e+00> : vector<8x16xf32>
    %1 = vector.multi_reduction <add>, %0, %cst [1] : vector<8x8x16xf32> to vector<8x16xf32>
    %cst_2 = arith.constant 1.250000e-01 : f32
    %2 = vector.broadcast %cst_2 : f32 to vector<8x16xf32>
    %3 = arith.mulf %1, %2 : vector<8x16xf32>
    %c0_3 = arith.constant 0 : index
    %c0_4 = arith.constant 0 : index
    %4 = vector.load %arg2[%c0_3, %c0_4] : memref<34x128xf32, #tpu.memory_space<vmem>>, vector<34x128xf32>
    %5 = vector.extract_strided_slice %4 {offsets = [0, 0], sizes = [32, 128], strides = [1, 1]} : vector<34x128xf32> to vector<32x128xf32>
    %6 = vector.extract_strided_slice %4 {offsets = [32, 0], sizes = [1, 128], strides = [1, 1]} : vector<34x128xf32> to vector<1x128xf32>
    %7 = vector.extract_strided_slice %4 {offsets = [33, 0], sizes = [1, 128], strides = [1, 1]} : vector<34x128xf32> to vector<1x128xf32>
    %c0_5 = arith.constant 0 : index
    %c0_6 = arith.constant 0 : index
    %8 = vector.load %arg3[%c0_5, %c0_6] : memref<33x128xf32, #tpu.memory_space<vmem>>, vector<33x128xf32>
    %9 = vector.extract_strided_slice %8 {offsets = [0, 0], sizes = [32, 32], strides = [1, 1]} : vector<33x128xf32> to vector<32x32xf32>
    %10 = vector.extract_strided_slice %8 {offsets = [0, 32], sizes = [16, 32], strides = [1, 1]} : vector<33x128xf32> to vector<16x32xf32>
    %11 = vector.extract_strided_slice %8 {offsets = [32, 0], sizes = [1, 128], strides = [1, 1]} : vector<33x128xf32> to vector<1x128xf32>
    %12 = vector.extract_strided_slice %11 {offsets = [0, 0], sizes = [1, 32], strides = [1, 1]} : vector<1x128xf32> to vector<1x32xf32>
    %13 = vector.extract_strided_slice %11 {offsets = [0, 32], sizes = [1, 32], strides = [1, 1]} : vector<1x128xf32> to vector<1x32xf32>
    %14 = vector.extract_strided_slice %11 {offsets = [0, 64], sizes = [1, 16], strides = [1, 1]} : vector<1x128xf32> to vector<1x16xf32>
    %15 = vector.extract_strided_slice %11 {offsets = [0, 80], sizes = [1, 1], strides = [1, 1]} : vector<1x128xf32> to vector<1x1xf32>
    %16 = vector.extract_strided_slice %11 {offsets = [0, 81], sizes = [1, 1], strides = [1, 1]} : vector<1x128xf32> to vector<1x1xf32>
    %17 = vector.extract_strided_slice %11 {offsets = [0, 82], sizes = [1, 1], strides = [1, 1]} : vector<1x128xf32> to vector<1x1xf32>
    %18 = vector.broadcast %14 : vector<1x16xf32> to vector<8x16xf32>
    %19 = arith.mulf %3, %18 : vector<8x16xf32>
    %cst_7 = arith.constant dense<0.000000e+00> : vector<8xf32>
    %20 = vector.multi_reduction <add>, %19, %cst_7 [1] : vector<8x16xf32> to vector<8xf32>
    %21 = vector.shape_cast %20 : vector<8xf32> to vector<8x1xf32>
    %22 = vector.broadcast %16 : vector<1x1xf32> to vector<8x1xf32>
    %23 = arith.addf %21, %22 : vector<8x1xf32>
    %24 = vector.shape_cast %23 : vector<8x1xf32> to vector<1x8x1xf32>
    %c0_8 = arith.constant 0 : index
    %c0_9 = arith.constant 0 : index
    %25 = vector.load %arg1[%c0_8, %c0_9] : memref<6x8xf32, #tpu.memory_space<vmem>>, vector<6x8xf32>
    %26 = vector.shape_cast %25 : vector<6x8xf32> to vector<6x8x1xf32>
    %27 = vector.shape_cast %15 : vector<1x1xf32> to vector<1x1x1xf32>
    %28 = vector.broadcast %27 : vector<1x1x1xf32> to vector<6x8x1xf32>
    %29 = arith.mulf %26, %28 : vector<6x8x1xf32>
    %30 = vector.broadcast %24 : vector<1x8x1xf32> to vector<6x8x1xf32>
    %31 = arith.addf %30, %29 : vector<6x8x1xf32>
    %32 = vector.shape_cast %6 : vector<1x128xf32> to vector<1x1x128xf32>
    %33 = vector.broadcast %31 : vector<6x8x1xf32> to vector<6x8x128xf32>
    %34 = vector.broadcast %32 : vector<1x1x128xf32> to vector<6x8x128xf32>
    %35 = arith.mulf %33, %34 : vector<6x8x128xf32>
    %36 = vector.shape_cast %7 : vector<1x128xf32> to vector<1x1x128xf32>
    %37 = vector.broadcast %36 : vector<1x1x128xf32> to vector<6x8x128xf32>
    %38 = arith.addf %35, %37 : vector<6x8x128xf32>
    %cst_10 = arith.constant dense<0.000000e+00> : vector<8x32xf32>
    %39 = tpu.matmul %3, %10, %cst_10 {dimension_numbers = #tpu.dot_dimension_numbers<[1], [0], [0], [1], [0, 0, 1, 1], [], []>} : vector<8x16xf32>, vector<16x32xf32>, vector<8x32xf32> -> vector<8x32xf32>
    %40 = vector.broadcast %12 : vector<1x32xf32> to vector<8x32xf32>
    %41 = arith.addf %39, %40 : vector<8x32xf32>
    %cst_11 = arith.constant 0.000000e+00 : f32
    %42 = vector.broadcast %cst_11 : f32 to vector<8x32xf32>
    %cst_12 = arith.constant 0.000000e+00 : f32
    %43 = vector.broadcast %cst_12 : f32 to vector<8x32xf32>
    %44 = vector.extract_strided_slice %38 {offsets = [0, 0, 0], sizes = [1, 8, 128], strides = [1, 1, 1]} : vector<6x8x128xf32> to vector<1x8x128xf32>
    %45 = vector.shape_cast %44 : vector<1x8x128xf32> to vector<8x128xf32>
    %cst_13 = arith.constant dense<0.000000e+00> : vector<8x128xf32>
    %46 = tpu.matmul %42, %5, %cst_13 {dimension_numbers = #tpu.dot_dimension_numbers<[1], [0], [0], [1], [0, 0, 1, 1], [], []>} : vector<8x32xf32>, vector<32x128xf32>, vector<8x128xf32> -> vector<8x128xf32>
    %47 = arith.addf %45, %46 : vector<8x128xf32>
    %48 = arith.negf %47 : vector<8x128xf32>
    %49 = math.exp %48 : vector<8x128xf32>
    %cst_14 = arith.constant 1.000000e+00 : f32
    %50 = vector.broadcast %cst_14 : f32 to vector<8x128xf32>
    %51 = arith.addf %50, %49 : vector<8x128xf32>
    %52 = arith.divf %50, %51 : vector<8x128xf32>
    %53 = math.tanh %47 : vector<8x128xf32>
    %54 = vector.extract_strided_slice %52 {offsets = [0, 0], sizes = [8, 32], strides = [1, 1]} : vector<8x128xf32> to vector<8x32xf32>
    %55 = vector.extract_strided_slice %52 {offsets = [0, 32], sizes = [8, 32], strides = [1, 1]} : vector<8x128xf32> to vector<8x32xf32>
    %56 = vector.extract_strided_slice %53 {offsets = [0, 64], sizes = [8, 32], strides = [1, 1]} : vector<8x128xf32> to vector<8x32xf32>
    %57 = vector.extract_strided_slice %52 {offsets = [0, 96], sizes = [8, 32], strides = [1, 1]} : vector<8x128xf32> to vector<8x32xf32>
    %58 = arith.mulf %55, %43 : vector<8x32xf32>
    %59 = arith.mulf %54, %56 : vector<8x32xf32>
    %60 = arith.addf %58, %59 : vector<8x32xf32>
    %61 = math.tanh %60 : vector<8x32xf32>
    %62 = arith.mulf %57, %61 : vector<8x32xf32>
    %63 = vector.extract_strided_slice %38 {offsets = [1, 0, 0], sizes = [1, 8, 128], strides = [1, 1, 1]} : vector<6x8x128xf32> to vector<1x8x128xf32>
    %64 = vector.shape_cast %63 : vector<1x8x128xf32> to vector<8x128xf32>
    %cst_15 = arith.constant dense<0.000000e+00> : vector<8x128xf32>
    %65 = tpu.matmul %62, %5, %cst_15 {dimension_numbers = #tpu.dot_dimension_numbers<[1], [0], [0], [1], [0, 0, 1, 1], [], []>} : vector<8x32xf32>, vector<32x128xf32>, vector<8x128xf32> -> vector<8x128xf32>
    %66 = arith.addf %64, %65 : vector<8x128xf32>
    %67 = arith.negf %66 : vector<8x128xf32>
    %68 = math.exp %67 : vector<8x128xf32>
    %cst_16 = arith.constant 1.000000e+00 : f32
    %69 = vector.broadcast %cst_16 : f32 to vector<8x128xf32>
    %70 = arith.addf %69, %68 : vector<8x128xf32>
    %71 = arith.divf %69, %70 : vector<8x128xf32>
    %72 = math.tanh %66 : vector<8x128xf32>
    %73 = vector.extract_strided_slice %71 {offsets = [0, 0], sizes = [8, 32], strides = [1, 1]} : vector<8x128xf32> to vector<8x32xf32>
    %74 = vector.extract_strided_slice %71 {offsets = [0, 32], sizes = [8, 32], strides = [1, 1]} : vector<8x128xf32> to vector<8x32xf32>
    %75 = vector.extract_strided_slice %72 {offsets = [0, 64], sizes = [8, 32], strides = [1, 1]} : vector<8x128xf32> to vector<8x32xf32>
    %76 = vector.extract_strided_slice %71 {offsets = [0, 96], sizes = [8, 32], strides = [1, 1]} : vector<8x128xf32> to vector<8x32xf32>
    %77 = arith.mulf %74, %60 : vector<8x32xf32>
    %78 = arith.mulf %73, %75 : vector<8x32xf32>
    %79 = arith.addf %77, %78 : vector<8x32xf32>
    %80 = math.tanh %79 : vector<8x32xf32>
    %81 = arith.mulf %76, %80 : vector<8x32xf32>
    %82 = vector.extract_strided_slice %38 {offsets = [2, 0, 0], sizes = [1, 8, 128], strides = [1, 1, 1]} : vector<6x8x128xf32> to vector<1x8x128xf32>
    %83 = vector.shape_cast %82 : vector<1x8x128xf32> to vector<8x128xf32>
    %cst_17 = arith.constant dense<0.000000e+00> : vector<8x128xf32>
    %84 = tpu.matmul %81, %5, %cst_17 {dimension_numbers = #tpu.dot_dimension_numbers<[1], [0], [0], [1], [0, 0, 1, 1], [], []>} : vector<8x32xf32>, vector<32x128xf32>, vector<8x128xf32> -> vector<8x128xf32>
    %85 = arith.addf %83, %84 : vector<8x128xf32>
    %86 = arith.negf %85 : vector<8x128xf32>
    %87 = math.exp %86 : vector<8x128xf32>
    %cst_18 = arith.constant 1.000000e+00 : f32
    %88 = vector.broadcast %cst_18 : f32 to vector<8x128xf32>
    %89 = arith.addf %88, %87 : vector<8x128xf32>
    %90 = arith.divf %88, %89 : vector<8x128xf32>
    %91 = math.tanh %85 : vector<8x128xf32>
    %92 = vector.extract_strided_slice %90 {offsets = [0, 0], sizes = [8, 32], strides = [1, 1]} : vector<8x128xf32> to vector<8x32xf32>
    %93 = vector.extract_strided_slice %90 {offsets = [0, 32], sizes = [8, 32], strides = [1, 1]} : vector<8x128xf32> to vector<8x32xf32>
    %94 = vector.extract_strided_slice %91 {offsets = [0, 64], sizes = [8, 32], strides = [1, 1]} : vector<8x128xf32> to vector<8x32xf32>
    %95 = vector.extract_strided_slice %90 {offsets = [0, 96], sizes = [8, 32], strides = [1, 1]} : vector<8x128xf32> to vector<8x32xf32>
    %96 = arith.mulf %93, %79 : vector<8x32xf32>
    %97 = arith.mulf %92, %94 : vector<8x32xf32>
    %98 = arith.addf %96, %97 : vector<8x32xf32>
    %99 = math.tanh %98 : vector<8x32xf32>
    %100 = arith.mulf %95, %99 : vector<8x32xf32>
    %101 = vector.extract_strided_slice %38 {offsets = [3, 0, 0], sizes = [1, 8, 128], strides = [1, 1, 1]} : vector<6x8x128xf32> to vector<1x8x128xf32>
    %102 = vector.shape_cast %101 : vector<1x8x128xf32> to vector<8x128xf32>
    %cst_19 = arith.constant dense<0.000000e+00> : vector<8x128xf32>
    %103 = tpu.matmul %100, %5, %cst_19 {dimension_numbers = #tpu.dot_dimension_numbers<[1], [0], [0], [1], [0, 0, 1, 1], [], []>} : vector<8x32xf32>, vector<32x128xf32>, vector<8x128xf32> -> vector<8x128xf32>
    %104 = arith.addf %102, %103 : vector<8x128xf32>
    %105 = arith.negf %104 : vector<8x128xf32>
    %106 = math.exp %105 : vector<8x128xf32>
    %cst_20 = arith.constant 1.000000e+00 : f32
    %107 = vector.broadcast %cst_20 : f32 to vector<8x128xf32>
    %108 = arith.addf %107, %106 : vector<8x128xf32>
    %109 = arith.divf %107, %108 : vector<8x128xf32>
    %110 = math.tanh %104 : vector<8x128xf32>
    %111 = vector.extract_strided_slice %109 {offsets = [0, 0], sizes = [8, 32], strides = [1, 1]} : vector<8x128xf32> to vector<8x32xf32>
    %112 = vector.extract_strided_slice %109 {offsets = [0, 32], sizes = [8, 32], strides = [1, 1]} : vector<8x128xf32> to vector<8x32xf32>
    %113 = vector.extract_strided_slice %110 {offsets = [0, 64], sizes = [8, 32], strides = [1, 1]} : vector<8x128xf32> to vector<8x32xf32>
    %114 = vector.extract_strided_slice %109 {offsets = [0, 96], sizes = [8, 32], strides = [1, 1]} : vector<8x128xf32> to vector<8x32xf32>
    %115 = arith.mulf %112, %98 : vector<8x32xf32>
    %116 = arith.mulf %111, %113 : vector<8x32xf32>
    %117 = arith.addf %115, %116 : vector<8x32xf32>
    %118 = math.tanh %117 : vector<8x32xf32>
    %119 = arith.mulf %114, %118 : vector<8x32xf32>
    %120 = vector.extract_strided_slice %38 {offsets = [4, 0, 0], sizes = [1, 8, 128], strides = [1, 1, 1]} : vector<6x8x128xf32> to vector<1x8x128xf32>
    %121 = vector.shape_cast %120 : vector<1x8x128xf32> to vector<8x128xf32>
    %cst_21 = arith.constant dense<0.000000e+00> : vector<8x128xf32>
    %122 = tpu.matmul %119, %5, %cst_21 {dimension_numbers = #tpu.dot_dimension_numbers<[1], [0], [0], [1], [0, 0, 1, 1], [], []>} : vector<8x32xf32>, vector<32x128xf32>, vector<8x128xf32> -> vector<8x128xf32>
    %123 = arith.addf %121, %122 : vector<8x128xf32>
    %124 = arith.negf %123 : vector<8x128xf32>
    %125 = math.exp %124 : vector<8x128xf32>
    %cst_22 = arith.constant 1.000000e+00 : f32
    %126 = vector.broadcast %cst_22 : f32 to vector<8x128xf32>
    %127 = arith.addf %126, %125 : vector<8x128xf32>
    %128 = arith.divf %126, %127 : vector<8x128xf32>
    %129 = math.tanh %123 : vector<8x128xf32>
    %130 = vector.extract_strided_slice %128 {offsets = [0, 0], sizes = [8, 32], strides = [1, 1]} : vector<8x128xf32> to vector<8x32xf32>
    %131 = vector.extract_strided_slice %128 {offsets = [0, 32], sizes = [8, 32], strides = [1, 1]} : vector<8x128xf32> to vector<8x32xf32>
    %132 = vector.extract_strided_slice %129 {offsets = [0, 64], sizes = [8, 32], strides = [1, 1]} : vector<8x128xf32> to vector<8x32xf32>
    %133 = vector.extract_strided_slice %128 {offsets = [0, 96], sizes = [8, 32], strides = [1, 1]} : vector<8x128xf32> to vector<8x32xf32>
    %134 = arith.mulf %131, %117 : vector<8x32xf32>
    %135 = arith.mulf %130, %132 : vector<8x32xf32>
    %136 = arith.addf %134, %135 : vector<8x32xf32>
    %137 = math.tanh %136 : vector<8x32xf32>
    %138 = arith.mulf %133, %137 : vector<8x32xf32>
    %139 = vector.extract_strided_slice %38 {offsets = [5, 0, 0], sizes = [1, 8, 128], strides = [1, 1, 1]} : vector<6x8x128xf32> to vector<1x8x128xf32>
    %140 = vector.shape_cast %139 : vector<1x8x128xf32> to vector<8x128xf32>
    %cst_23 = arith.constant dense<0.000000e+00> : vector<8x128xf32>
    %141 = tpu.matmul %138, %5, %cst_23 {dimension_numbers = #tpu.dot_dimension_numbers<[1], [0], [0], [1], [0, 0, 1, 1], [], []>} : vector<8x32xf32>, vector<32x128xf32>, vector<8x128xf32> -> vector<8x128xf32>
    %142 = arith.addf %140, %141 : vector<8x128xf32>
    %143 = arith.negf %142 : vector<8x128xf32>
    %144 = math.exp %143 : vector<8x128xf32>
    %cst_24 = arith.constant 1.000000e+00 : f32
    %145 = vector.broadcast %cst_24 : f32 to vector<8x128xf32>
    %146 = arith.addf %145, %144 : vector<8x128xf32>
    %147 = arith.divf %145, %146 : vector<8x128xf32>
    %148 = math.tanh %142 : vector<8x128xf32>
    %149 = vector.extract_strided_slice %147 {offsets = [0, 0], sizes = [8, 32], strides = [1, 1]} : vector<8x128xf32> to vector<8x32xf32>
    %150 = vector.extract_strided_slice %147 {offsets = [0, 32], sizes = [8, 32], strides = [1, 1]} : vector<8x128xf32> to vector<8x32xf32>
    %151 = vector.extract_strided_slice %148 {offsets = [0, 64], sizes = [8, 32], strides = [1, 1]} : vector<8x128xf32> to vector<8x32xf32>
    %152 = vector.extract_strided_slice %147 {offsets = [0, 96], sizes = [8, 32], strides = [1, 1]} : vector<8x128xf32> to vector<8x32xf32>
    %153 = arith.mulf %150, %136 : vector<8x32xf32>
    %154 = arith.mulf %149, %151 : vector<8x32xf32>
    %155 = arith.addf %153, %154 : vector<8x32xf32>
    %156 = math.tanh %155 : vector<8x32xf32>
    %157 = arith.mulf %152, %156 : vector<8x32xf32>
    %cst_25 = arith.constant dense<0.000000e+00> : vector<8x32xf32>
    %158 = tpu.matmul %157, %9, %cst_25 {dimension_numbers = #tpu.dot_dimension_numbers<[1], [0], [0], [1], [0, 0, 1, 1], [], []>} : vector<8x32xf32>, vector<32x32xf32>, vector<8x32xf32> -> vector<8x32xf32>
    %159 = arith.addf %158, %41 : vector<8x32xf32>
    %160 = vector.broadcast %13 : vector<1x32xf32> to vector<8x32xf32>
    %161 = arith.mulf %159, %160 : vector<8x32xf32>
    %cst_26 = arith.constant dense<0.000000e+00> : vector<8xf32>
    %162 = vector.multi_reduction <add>, %161, %cst_26 [1] : vector<8x32xf32> to vector<8xf32>
    %163 = vector.shape_cast %162 : vector<8xf32> to vector<8x1xf32>
    %164 = vector.broadcast %17 : vector<1x1xf32> to vector<8x1xf32>
    %165 = arith.addf %163, %164 : vector<8x1xf32>
    %c0_27 = arith.constant 0 : index
    %c0_28 = arith.constant 0 : index
    %166 = vector.load %arg4[%c0_27, %c0_28] : memref<8x1xf32, #tpu.memory_space<vmem>>, vector<8x1xf32>
    tpu.vector_store %arg4[%c0_27, %c0_28], %165 {strides = array<i32>} : memref<8x1xf32, #tpu.memory_space<vmem>>, vector<8x1xf32>,
    return
  }
}

</mosaic_0001>

<llo_original>
// kernel: tpu_custom_call.1
$region0: #{tpu_custom_call.1}
  #allocation0 [shape = 'u32[]', space=smem, size = 0x4, offset = 0x4, fixed_abs, tag = 'smem constant byte address 0x4 - core index']
  #allocation1 [shape = 'u32[144,128]{1,0:T(1,128)}', space=vmem, size = 0x12000, scoped, tag = 'internal scratch']
  %s0 = inlined_call_operand.hbm [shape: f32[8,8,16], index: 0, kind: input, shape index: {}]
  %s1 = inlined_call_operand.hbm [shape: f32[6,8], index: 1, kind: input, shape index: {}]
  %s2 = inlined_call_operand.hbm [shape: f32[34,128], index: 2, kind: input, shape index: {}]
  %s3 = inlined_call_operand.hbm [shape: f32[33,128], index: 3, kind: input, shape index: {}]
  %s4 = inlined_call_operand.vmem [shape: f32[8,1], index: 4, kind: output, shape index: {}]
  %s5 = sld [smem:[#allocation0]]
  $region42: #{tpu_custom_call.1} parent=0
    _
  %s7 = ssub.s32 1, %s5
  %s8 = scalar_select 0, %s7, %s5
  $region1: #{tpu_custom_call.1} parent=0
    #allocation2 [shape = 'u8[32768]{0}', space=vmem, size = 0x8000, scoped, tag = 'input window, operand 0, single buffered']
    #allocation3 [shape = 's32[1]{0}', space=sflag, size = 0x4, scoped, tag = 'scoped memory for tpu_custom_call.1']
    #allocation4 [shape = 'u8[4096]{0}', space=vmem, size = 0x1000, scoped, tag = 'input window, operand 1, single buffered']
    #allocation5 [shape = 's32[1]{0}', space=sflag, size = 0x4, scoped, tag = 'scoped memory for tpu_custom_call.1']
    #allocation6 [shape = 'u8[20480]{0}', space=vmem, size = 0x5000, scoped, tag = 'input window, operand 2, single buffered']
    #allocation7 [shape = 'u8[20480]{0}', space=vmem, size = 0x5000, scoped, tag = 'input window, operand 3, single buffered']
    #allocation8 [shape = 's32[1]{0}', space=sflag, size = 0x4, scoped, tag = 'scoped memory for tpu_custom_call.1']
    %9 = vsyncpa [#allocation3], 0
    %10 = vsyncpa [#allocation5], 0
    %11 = vsyncpa [#allocation8], 0
    // Predicated region
    $region2: #{tpu_custom_call.1} parent=1 // pred_check
      _
    $region3: #{tpu_custom_call.1} parent=1 // pred_check_branch
      %13 = sbr.rel (0) target = $region5
    $region4: #{tpu_custom_call.1} parent=1 // pred_region
      %s15 = ssub.s32 1024, 1024
      %16 = vsyncadd [#allocation3], %s15
      %s17 = sshll.u32 [#allocation2], 4
      %s18 = int_to_ptr.vmem [resolvable:$true] %s17
      %23 = dma.hbm_to_vmem [thread:$0]  %s0, 1024, %s18, [#allocation3], 128, 128, 8
    $region5: #{tpu_custom_call.1} parent=1 // pred_fallthru
      _
    // Predicated region
    $region6: #{tpu_custom_call.1} parent=1 // pred_check
      _
    $region7: #{tpu_custom_call.1} parent=1 // pred_check_branch
      %25 = sbr.rel (0) target = $region9
    $region8: #{tpu_custom_call.1} parent=1 // pred_region
      %s27 = ssub.s32 128, 128
      %28 = vsyncadd [#allocation5], %s27
      %s30 = sshll.u32 [#allocation4], 4
      %s31 = int_to_ptr.vmem [resolvable:$true] %s30
      %33 = dma.hbm_to_vmem [thread:$0]  %s1, 128, %s31, [#allocation5]
    $region9: #{tpu_custom_call.1} parent=1 // pred_fallthru
      _
    // Predicated region
    $region10: #{tpu_custom_call.1} parent=1 // pred_check
      _
    $region11: #{tpu_custom_call.1} parent=1 // pred_check_branch
      %35 = sbr.rel (0) target = $region13
    $region12: #{tpu_custom_call.1} parent=1 // pred_region
      %s37 = ssub.s32 640, 640
      %38 = vsyncadd [#allocation5], %s37
      %s39 = sshll.u32 [#allocation6], 4
      %s40 = int_to_ptr.vmem [resolvable:$true] %s39
      %45 = dma.hbm_to_vmem [thread:$0]  %s2, 640, %s40, [#allocation5], 128, 128, 8
    $region13: #{tpu_custom_call.1} parent=1 // pred_fallthru
      _
    // Predicated region
    $region14: #{tpu_custom_call.1} parent=1 // pred_check
      _
    $region15: #{tpu_custom_call.1} parent=1 // pred_check_branch
      %47 = sbr.rel (0) target = $region17
    $region16: #{tpu_custom_call.1} parent=1 // pred_region
      %s49 = ssub.s32 640, 640
      %50 = vsyncadd [#allocation8], %s49
      %s51 = sshll.u32 [#allocation7], 4
      %s52 = int_to_ptr.vmem [resolvable:$true] %s51
      %57 = dma.hbm_to_vmem [thread:$0]  %s3, 640, %s52, [#allocation8], 128, 128, 8
    $region17: #{tpu_custom_call.1} parent=1 // pred_fallthru
      _
    // Predicated region
    $region18: #{tpu_custom_call.1} parent=1 // pred_check
      _
    $region19: #{tpu_custom_call.1} parent=1 // pred_check_branch
      %59 = sbr.rel (0) target = $region21
    $region20: #{tpu_custom_call.1} parent=1 // pred_region
      %60 = dma.done [#allocation3], 1024
    $region21: #{tpu_custom_call.1} parent=1 // pred_fallthru
      _
    // Predicated region
    $region22: #{tpu_custom_call.1} parent=1 // pred_check
      _
    $region23: #{tpu_custom_call.1} parent=1 // pred_check_branch
      %62 = sbr.rel (0) target = $region25
    $region24: #{tpu_custom_call.1} parent=1 // pred_region
      %63 = dma.done [#allocation5], 128
    $region25: #{tpu_custom_call.1} parent=1 // pred_fallthru
      _
    // Predicated region
    $region26: #{tpu_custom_call.1} parent=1 // pred_check
      _
    $region27: #{tpu_custom_call.1} parent=1 // pred_check_branch
      %65 = sbr.rel (0) target = $region29
    $region28: #{tpu_custom_call.1} parent=1 // pred_region
      %66 = dma.done [#allocation5], 640
    $region29: #{tpu_custom_call.1} parent=1 // pred_fallthru
      _
    // Predicated region
    $region30: #{tpu_custom_call.1} parent=1 // pred_check
      _
    $region31: #{tpu_custom_call.1} parent=1 // pred_check_branch
      %68 = sbr.rel (0) target = $region33
    $region32: #{tpu_custom_call.1} parent=1 // pred_region
      %69 = dma.done [#allocation8], 640
    $region33: #{tpu_custom_call.1} parent=1 // pred_fallthru
      _
    %v70 = vld [vmem:[#allocation2] sm:$0xff]
    %v71 = vld [vmem:[#allocation2 + $0x8] sm:$0xff]
    %v72 = vld [vmem:[#allocation2 + $0x10] sm:$0xff]
    %v73 = vld [vmem:[#allocation2 + $0x18] sm:$0xff]
    %v74 = vld [vmem:[#allocation2 + $0x20] sm:$0xff]
    %v75 = vld [vmem:[#allocation2 + $0x28] sm:$0xff]
    %v76 = vld [vmem:[#allocation2 + $0x30] sm:$0xff]
    %v77 = vld [vmem:[#allocation2 + $0x38] sm:$0xff]
    %vm78 = vcmask 130048
    %v79 = vsel %vm78, %v70, 0.0
    %v80 = vrot.slane %v79, 4
    %v81 = vadd.f32 %v79, %v80
    %v82 = vrot.slane %v81, 2
    %v83 = vadd.f32 %v81, %v82
    %v84 = vrot.slane %v83, 1
    %v85 = vadd.f32 %v83, %v84
    %v86 = vsel %vm78, %v71, 0.0
    %v87 = vrot.slane %v86, 4
    %v88 = vadd.f32 %v86, %v87
    %v89 = vrot.slane %v88, 2
    %v90 = vadd.f32 %v88, %v89
    %v91 = vrot.slane %v90, 1
    %v92 = vadd.f32 %v90, %v91
    %v93 = vsel %vm78, %v72, 0.0
    %v94 = vrot.slane %v93, 4
    %v95 = vadd.f32 %v93, %v94
    %v96 = vrot.slane %v95, 2
    %v97 = vadd.f32 %v95, %v96
    %v98 = vrot.slane %v97, 1
    %v99 = vadd.f32 %v97, %v98
    %v100 = vsel %vm78, %v73, 0.0
    %v101 = vrot.slane %v100, 4
    %v102 = vadd.f32 %v100, %v101
    %v103 = vrot.slane %v102, 2
    %v104 = vadd.f32 %v102, %v103
    %v105 = vrot.slane %v104, 1
    %v106 = vadd.f32 %v104, %v105
    %v107 = vsel %vm78, %v74, 0.0
    %v108 = vrot.slane %v107, 4
    %v109 = vadd.f32 %v107, %v108
    %v110 = vrot.slane %v109, 2
    %v111 = vadd.f32 %v109, %v110
    %v112 = vrot.slane %v111, 1
    %v113 = vadd.f32 %v111, %v112
    %v114 = vsel %vm78, %v75, 0.0
    %v115 = vrot.slane %v114, 4
    %v116 = vadd.f32 %v114, %v115
    %v117 = vrot.slane %v116, 2
    %v118 = vadd.f32 %v116, %v117
    %v119 = vrot.slane %v118, 1
    %v120 = vadd.f32 %v118, %v119
    %v121 = vsel %vm78, %v76, 0.0
    %v122 = vrot.slane %v121, 4
    %v123 = vadd.f32 %v121, %v122
    %v124 = vrot.slane %v123, 2
    %v125 = vadd.f32 %v123, %v124
    %v126 = vrot.slane %v125, 1
    %v127 = vadd.f32 %v125, %v126
    %v128 = vsel %vm78, %v77, 0.0
    %v129 = vrot.slane %v128, 4
    %v130 = vadd.f32 %v128, %v129
    %v131 = vrot.slane %v130, 2
    %v132 = vadd.f32 %v130, %v131
    %v133 = vrot.slane %v132, 1
    %v134 = vadd.f32 %v132, %v133
    %v135 = vmul.f32 %v85, 0.125
    %v136 = vmul.f32 %v92, 0.125
    %v137 = vmul.f32 %v99, 0.125
    %v138 = vmul.f32 %v106, 0.125
    %v139 = vmul.f32 %v113, 0.125
    %v140 = vmul.f32 %v120, 0.125
    %v141 = vmul.f32 %v127, 0.125
    %v142 = vmul.f32 %v134, 0.125
    %v143 = vld [vmem:[#allocation6] sm:$0xff]
    %v144 = vld [vmem:[#allocation6 + $0x8] sm:$0xff]
    %v145 = vld [vmem:[#allocation6 + $0x10] sm:$0xff]
    %v146 = vld [vmem:[#allocation6 + $0x18] sm:$0xff]
    %v147 = vld [vmem:[#allocation6 + $0x20] sm:$0x3]
    %v148 = vld [vmem:[#allocation7] sm:$0xff]
    %v149 = vld [vmem:[#allocation7 + $0x8] sm:$0xff]
    %v150 = vld [vmem:[#allocation7 + $0x10] sm:$0xff]
    %v151 = vld [vmem:[#allocation7 + $0x18] sm:$0xff]
    %v152 = vld [vmem:[#allocation7 + $0x20] sm:$0x1]
    %v153 = vlaneseq
    %v154 = vshrl.u32 %v153, 7
    %v155 = vsub.s32 0, %v154
    %v156 = vrot.slane %v152, %v155
    %158 = vrot.lane.b32.xlu0 %v156, 64
    %v159 = vpop.permute.xlu0 %158
    %v161 = vmul.f32 %v135, %v159
    %v162 = vmul.f32 %v136, %v159
    %v163 = vmul.f32 %v137, %v159
    %v164 = vmul.f32 %v138, %v159
    %v165 = vmul.f32 %v139, %v159
    %v166 = vmul.f32 %v140, %v159
    %v167 = vmul.f32 %v141, %v159
    %v168 = vmul.f32 %v142, %v159
    %v177 = vrot.slane %v162, 7
    %vm178 = vcmask 1041409
    %v179 = vsel %vm178, %v177, %v161
    %v180 = vrot.slane %v163, 6
    %vm181 = vcmask 1042434
    %v182 = vsel %vm181, %v180, %v179
    %v183 = vrot.slane %v164, 5
    %vm184 = vcmask 1043459
    %v185 = vsel %vm184, %v183, %v182
    %v186 = vrot.slane %v165, 4
    %vm187 = vcmask 1044484
    %v188 = vsel %vm187, %v186, %v185
    %v189 = vrot.slane %v166, 3
    %vm190 = vcmask 1045509
    %v191 = vsel %vm190, %v189, %v188
    %v192 = vrot.slane %v167, 2
    %vm193 = vcmask 1046534
    %v194 = vsel %vm193, %v192, %v191
    %v195 = vrot.slane %v168, 1
    %vm196 = vcmask 1047559
    %v197 = vsel %vm196, %v195, %v194
    %v199 = vsel %vm78, %v197, 0.0
    %200 = vadd.xlane.f32.xlu0 %v199
    %v201 = vpop.xlane.xlu0 %200
    %v202 = vadd.f32 %v201, %v156
    %v203 = vld [vmem:[#allocation4] sm:$0x3f]
    %v204 = vlaneseq
    %v205 = vshrl.u32 %v204, 7
    %v206 = vsub.s32 0, %v205
    %v207 = vrot.slane %v203, %v206
    %209 = vbcast.lane.b32.xlu0 %v207, 256
    %v210 = vpop.permute.xlu0 %209
    %v211 = vlaneseq
    %v212 = vshrl.u32 %v211, 7
    %v213 = vsub.s32 1, %v212
    %v214 = vrot.slane %v203, %v213
    %216 = vbcast.lane.b32.xlu0 %v214, 256
    %v217 = vpop.permute.xlu0 %216
    %v218 = vlaneseq
    %v219 = vshrl.u32 %v218, 7
    %v220 = vsub.s32 2, %v219
    %v221 = vrot.slane %v203, %v220
    %223 = vbcast.lane.b32.xlu0 %v221, 256
    %v224 = vpop.permute.xlu0 %223
    %v225 = vlaneseq
    %v226 = vshrl.u32 %v225, 7
    %v227 = vsub.s32 3, %v226
    %v228 = vrot.slane %v203, %v227
    %230 = vbcast.lane.b32.xlu0 %v228, 256
    %v231 = vpop.permute.xlu0 %230
    %v232 = vlaneseq
    %v233 = vshrl.u32 %v232, 7
    %v234 = vsub.s32 4, %v233
    %v235 = vrot.slane %v203, %v234
    %237 = vbcast.lane.b32.xlu0 %v235, 256
    %v238 = vpop.permute.xlu0 %237
    %v239 = vlaneseq
    %v240 = vshrl.u32 %v239, 7
    %v241 = vsub.s32 5, %v240
    %v242 = vrot.slane %v203, %v241
    %244 = vbcast.lane.b32.xlu0 %v242, 256
    %v245 = vpop.permute.xlu0 %244
    %v246 = vmul.f32 %v210, %v156
    %v247 = vmul.f32 %v217, %v156
    %v248 = vmul.f32 %v224, %v156
    %v249 = vmul.f32 %v231, %v156
    %v250 = vmul.f32 %v238, %v156
    %v251 = vmul.f32 %v245, %v156
    %258 = vrot.lane.b32.xlu0 %v246, 1
    %v259 = vpop.permute.xlu0 %258
    %260 = vrot.lane.b32.xlu0 %v247, 1
    %v261 = vpop.permute.xlu0 %260
    %262 = vrot.lane.b32.xlu0 %v248, 1
    %v263 = vpop.permute.xlu0 %262
    %264 = vrot.lane.b32.xlu0 %v249, 1
    %v265 = vpop.permute.xlu0 %264
    %266 = vrot.lane.b32.xlu0 %v250, 1
    %v267 = vpop.permute.xlu0 %266
    %268 = vrot.lane.b32.xlu0 %v251, 1
    %v269 = vpop.permute.xlu0 %268
    %v276 = vadd.f32 %v202, %v259
    %v277 = vadd.f32 %v202, %v261
    %v278 = vadd.f32 %v202, %v263
    %v279 = vadd.f32 %v202, %v265
    %v280 = vadd.f32 %v202, %v267
    %v281 = vadd.f32 %v202, %v269
    %283 = vset.pattern.permute.xlu0 81
    %284 = vperm.xlu0 %283, %v276
    %v285 = vpop.permute.xlu0 %284
    %288 = vset.pattern.permute.xlu0 81
    %289 = vperm.xlu0 %288, %v277
    %v290 = vpop.permute.xlu0 %289
    %293 = vset.pattern.permute.xlu0 81
    %294 = vperm.xlu0 %293, %v278
    %v295 = vpop.permute.xlu0 %294
    %298 = vset.pattern.permute.xlu0 81
    %299 = vperm.xlu0 %298, %v279
    %v300 = vpop.permute.xlu0 %299
    %303 = vset.pattern.permute.xlu0 81
    %304 = vperm.xlu0 %303, %v280
    %v305 = vpop.permute.xlu0 %304
    %308 = vset.pattern.permute.xlu0 81
    %309 = vperm.xlu0 %308, %v281
    %v310 = vpop.permute.xlu0 %309
    %v312 = vlaneseq
    %v313 = vshrl.u32 %v312, 7
    %v314 = vsub.s32 0, %v313
    %v315 = vrot.slane %v147, %v314
    %v316 = vmul.f32 %v285, %v315
    %v317 = vmul.f32 %v290, %v315
    %v318 = vmul.f32 %v295, %v315
    %v319 = vmul.f32 %v300, %v315
    %v320 = vmul.f32 %v305, %v315
    %v321 = vmul.f32 %v310, %v315
    %v322 = vlaneseq
    %v323 = vshrl.u32 %v322, 7
    %v324 = vsub.s32 1, %v323
    %v325 = vrot.slane %v147, %v324
    %v326 = vadd.f32 %v316, %v325
    %v327 = vadd.f32 %v317, %v325
    %v328 = vadd.f32 %v318, %v325
    %v329 = vadd.f32 %v319, %v325
    %v330 = vadd.f32 %v320, %v325
    %v331 = vadd.f32 %v321, %v325
    %v340 = vsel %vm178, %v136, %v135
    %v341 = vsel %vm181, %v137, %v340
    %v342 = vsel %vm184, %v138, %v341
    %v343 = vsel %vm187, %v139, %v342
    %v344 = vsel %vm190, %v140, %v343
    %v345 = vsel %vm193, %v141, %v344
    %v346 = vsel %vm196, %v142, %v345
    %349 = vrot.lane.b32.xlu0 %v148, 96
    %v350 = vpop.permute.xlu0 %349
    %351 = vrot.lane.b32.xlu0 %v149, 96
    %v352 = vpop.permute.xlu0 %351
    %v355 = vsel %vm78, %v346, 0
    %357 = vmatprep.subr.mxu0 0.0
    %358 = vmatpush1.msra.mxu0 %v350
    %359 = vmatprep.subr.mxu0 0.0
    %360 = vmatpush1.msra.mxu0 %v352
    %361 = vmatprep.subr.mxu0 0.0
    %362 = vmatpush1.msra.mxu0 0.0
    %363 = vmatprep.subr.mxu0 0.0
    %364 = vmatpush1.msra.mxu0 0.0
    %365 = vmatprep.subr.mxu0 0.0
    %366 = vmatpush1.msra.mxu0 0.0
    %367 = vmatprep.subr.mxu0 0.0
    %368 = vmatpush1.msra.mxu0 0.0
    %369 = vmatprep.subr.mxu0 0.0
    %370 = vmatpush1.msra.mxu0 0.0
    %371 = vmatprep.subr.mxu0 0.0
    %372 = vmatpush1.msra.mxu0 0.0
    %373 = vmatprep.subr.mxu0 0.0
    %374 = vmatpush1.msra.mxu0 0.0
    %375 = vmatprep.subr.mxu0 0.0
    %376 = vmatpush1.msra.mxu0 0.0
    %377 = vmatprep.subr.mxu0 0.0
    %378 = vmatpush1.msra.mxu0 0.0
    %379 = vmatprep.subr.mxu0 0.0
    %380 = vmatpush1.msra.mxu0 0.0
    %381 = vmatprep.subr.mxu0 0.0
    %382 = vmatpush1.msra.mxu0 0.0
    %383 = vmatprep.subr.mxu0 0.0
    %384 = vmatpush1.msra.mxu0 0.0
    %385 = vmatprep.subr.mxu0 0.0
    %386 = vmatpush1.msra.mxu0 0.0
    %387 = vmatprep.subr.mxu0 0.0
    %388 = vmatpush1.msra.mxu0 0.0
    %389 = vmatprep.subr.mxu0 0.0
    %390 = vmatpush1.msra.mxu0 0.0
    %391 = vmatprep.subr.mxu0 0.0
    %392 = vmatpush1.msra.mxu0 0.0
    %393 = vmatprep.subr.mxu0 0.0
    %394 = vmatpush1.msra.mxu0 0.0
    %395 = vmatprep.subr.mxu0 0.0
    %396 = vmatpush1.msra.mxu0 0.0
    %397 = vmatprep.subr.mxu0 0.0
    %398 = vmatpush1.msra.mxu0 0.0
    %399 = vmatprep.subr.mxu0 0.0
    %400 = vmatpush1.msra.mxu0 0.0
    %401 = vmatprep.subr.mxu0 0.0
    %402 = vmatpush1.msra.mxu0 0.0
    %403 = vmatprep.subr.mxu0 0.0
    %404 = vmatpush1.msra.mxu0 0.0
    %405 = vmatprep.subr.mxu0 0.0
    %406 = vmatpush1.msra.mxu0 0.0
    %407 = vmatprep.subr.mxu0 0.0
    %408 = vmatpush1.msra.mxu0 0.0
    %409 = vmatprep.subr.mxu0 0.0
    %410 = vmatpush1.msra.mxu0 0.0
    %411 = vmatprep.subr.mxu0 0.0
    %412 = vmatpush1.msra.mxu0 0.0
    %413 = vmatprep.subr.mxu0 0.0
    %414 = vmatpush1.msra.mxu0 0.0
    %415 = vmatprep.subr.mxu0 0.0
    %416 = vmatpush1.msra.mxu0 0.0
    %417 = vmatprep.subr.mxu0 0.0
    %418 = vmatpush1.msra.mxu0 0.0
    %419 = vmatprep.subr.mxu0 0.0
    %420 = vmatpush1.msra.mxu0 0.0
    %421 = vmatprep.mubr.f32.mxu0 0.0
    %422 = vmatmul.mubr.f32.gmra.mrb[0].mxu0 %v355
    %v423 = vpop.f32.mrb[0].mxu0
    %v424 = vadd.f32 %v156, %v423
    %v425 = vpop.f32.mrb[0].mxu0
    %426 = vdwg.mxu0
    %vm427 = vcmask 261120
    %v429 = vsel %vm427, 0.0, 0
    %431 = vmatprep.subr.mxu0 0.0
    %432 = vmatpush1.msra.mxu0 %v143
    %433 = vmatprep.subr.mxu0 0.0
    %434 = vmatpush1.msra.mxu0 %v144
    %435 = vmatprep.subr.mxu0 0.0
    %436 = vmatpush1.msra.mxu0 %v145
    %437 = vmatprep.subr.mxu0 0.0
    %438 = vmatpush1.msra.mxu0 %v146
    %439 = vmatprep.subr.mxu0 0.0
    %440 = vmatpush1.msra.mxu0 0.0
    %441 = vmatprep.subr.mxu0 0.0
    %442 = vmatpush1.msra.mxu0 0.0
    %443 = vmatprep.subr.mxu0 0.0
    %444 = vmatpush1.msra.mxu0 0.0
    %445 = vmatprep.subr.mxu0 0.0
    %446 = vmatpush1.msra.mxu0 0.0
    %447 = vmatprep.subr.mxu0 0.0
    %448 = vmatpush1.msra.mxu0 0.0
    %449 = vmatprep.subr.mxu0 0.0
    %450 = vmatpush1.msra.mxu0 0.0
    %451 = vmatprep.subr.mxu0 0.0
    %452 = vmatpush1.msra.mxu0 0.0
    %453 = vmatprep.subr.mxu0 0.0
    %454 = vmatpush1.msra.mxu0 0.0
    %455 = vmatprep.subr.mxu0 0.0
    %456 = vmatpush1.msra.mxu0 0.0
    %457 = vmatprep.subr.mxu0 0.0
    %458 = vmatpush1.msra.mxu0 0.0
    %459 = vmatprep.subr.mxu0 0.0
    %460 = vmatpush1.msra.mxu0 0.0
    %461 = vmatprep.subr.mxu0 0.0
    %462 = vmatpush1.msra.mxu0 0.0
    %463 = vmatprep.subr.mxu0 0.0
    %464 = vmatpush1.msra.mxu0 0.0
    %465 = vmatprep.subr.mxu0 0.0
    %466 = vmatpush1.msra.mxu0 0.0
    %467 = vmatprep.subr.mxu0 0.0
    %468 = vmatpush1.msra.mxu0 0.0
    %469 = vmatprep.subr.mxu0 0.0
    %470 = vmatpush1.msra.mxu0 0.0
    %471 = vmatprep.subr.mxu0 0.0
    %472 = vmatpush1.msra.mxu0 0.0
    %473 = vmatprep.subr.mxu0 0.0
    %474 = vmatpush1.msra.mxu0 0.0
    %475 = vmatprep.subr.mxu0 0.0
    %476 = vmatpush1.msra.mxu0 0.0
    %477 = vmatprep.subr.mxu0 0.0
    %478 = vmatpush1.msra.mxu0 0.0
    %479 = vmatprep.subr.mxu0 0.0
    %480 = vmatpush1.msra.mxu0 0.0
    %481 = vmatprep.subr.mxu0 0.0
    %482 = vmatpush1.msra.mxu0 0.0
    %483 = vmatprep.subr.mxu0 0.0
    %484 = vmatpush1.msra.mxu0 0.0
    %485 = vmatprep.subr.mxu0 0.0
    %486 = vmatpush1.msra.mxu0 0.0
    %487 = vmatprep.subr.mxu0 0.0
    %488 = vmatpush1.msra.mxu0 0.0
    %489 = vmatprep.subr.mxu0 0.0
    %490 = vmatpush1.msra.mxu0 0.0
    %491 = vmatprep.subr.mxu0 0.0
    %492 = vmatpush1.msra.mxu0 0.0
    %493 = vmatprep.subr.mxu0 0.0
    %494 = vmatpush1.msra.mxu0 0.0
    %495 = vmatprep.mubr.f32.mxu0 0.0
    %496 = vmatmul.mubr.f32.gmra.mrb[0].mxu0 %v429
    %v497 = vpop.f32.mrb[0].mxu0
    %v498 = vadd.f32 0.0, %v497
    %v499 = vpop.f32.mrb[0].mxu0
    %500 = vdwg.mxu0
    %v501 = vadd.f32 %v326, %v498
    %v502 = vxor.u32 %v501, 2147483648
    %v503 = vmul.f32 %v502, 1.442695
    %v504 = vpow.pop %v503
    %v505 = vadd.f32 %v504, 1.0
    %v506 = vrcp.pop %v505
    %v507 = vmul.f32 1.0, %v506
    %v508 = vtanh.pop %v501
    %v509 = vmul.f32 %v507, 0.0
    %511 = vrot.lane.b32.xlu0 %v508, 64
    %v512 = vpop.permute.xlu0 %511
    %v514 = vmul.f32 %v507, %v512
    %516 = vrot.lane.b32.xlu0 %v514, 32
    %v517 = vpop.permute.xlu0 %516
    %v519 = vadd.f32 %v509, %v517
    %v520 = vtanh.pop %v519
    %522 = vrot.lane.b32.xlu0 %v520, 64
    %v523 = vpop.permute.xlu0 %522
    %v525 = vmul.f32 %v507, %v523
    %527 = vrot.lane.b32.xlu0 %v525, 32
    %v528 = vpop.permute.xlu0 %527
    %v529 = vsel %vm427, %v528, 0
    %531 = vmatprep.subr.mxu0 0.0
    %532 = vmatpush1.msra.mxu0 %v143
    %533 = vmatprep.subr.mxu0 0.0
    %534 = vmatpush1.msra.mxu0 %v144
    %535 = vmatprep.subr.mxu0 0.0
    %536 = vmatpush1.msra.mxu0 %v145
    %537 = vmatprep.subr.mxu0 0.0
    %538 = vmatpush1.msra.mxu0 %v146
    %539 = vmatprep.subr.mxu0 0.0
    %540 = vmatpush1.msra.mxu0 0.0
    %541 = vmatprep.subr.mxu0 0.0
    %542 = vmatpush1.msra.mxu0 0.0
    %543 = vmatprep.subr.mxu0 0.0
    %544 = vmatpush1.msra.mxu0 0.0
    %545 = vmatprep.subr.mxu0 0.0
    %546 = vmatpush1.msra.mxu0 0.0
    %547 = vmatprep.subr.mxu0 0.0
    %548 = vmatpush1.msra.mxu0 0.0
    %549 = vmatprep.subr.mxu0 0.0
    %550 = vmatpush1.msra.mxu0 0.0
    %551 = vmatprep.subr.mxu0 0.0
    %552 = vmatpush1.msra.mxu0 0.0
    %553 = vmatprep.subr.mxu0 0.0
    %554 = vmatpush1.msra.mxu0 0.0
    %555 = vmatprep.subr.mxu0 0.0
    %556 = vmatpush1.msra.mxu0 0.0
    %557 = vmatprep.subr.mxu0 0.0
    %558 = vmatpush1.msra.mxu0 0.0
    %559 = vmatprep.subr.mxu0 0.0
    %560 = vmatpush1.msra.mxu0 0.0
    %561 = vmatprep.subr.mxu0 0.0
    %562 = vmatpush1.msra.mxu0 0.0
    %563 = vmatprep.subr.mxu0 0.0
    %564 = vmatpush1.msra.mxu0 0.0
    %565 = vmatprep.subr.mxu0 0.0
    %566 = vmatpush1.msra.mxu0 0.0
    %567 = vmatprep.subr.mxu0 0.0
    %568 = vmatpush1.msra.mxu0 0.0
    %569 = vmatprep.subr.mxu0 0.0
    %570 = vmatpush1.msra.mxu0 0.0
    %571 = vmatprep.subr.mxu0 0.0
    %572 = vmatpush1.msra.mxu0 0.0
    %573 = vmatprep.subr.mxu0 0.0
    %574 = vmatpush1.msra.mxu0 0.0
    %575 = vmatprep.subr.mxu0 0.0
    %576 = vmatpush1.msra.mxu0 0.0
    %577 = vmatprep.subr.mxu0 0.0
    %578 = vmatpush1.msra.mxu0 0.0
    %579 = vmatprep.subr.mxu0 0.0
    %580 = vmatpush1.msra.mxu0 0.0
    %581 = vmatprep.subr.mxu0 0.0
    %582 = vmatpush1.msra.mxu0 0.0
    %583 = vmatprep.subr.mxu0 0.0
    %584 = vmatpush1.msra.mxu0 0.0
    %585 = vmatprep.subr.mxu0 0.0
    %586 = vmatpush1.msra.mxu0 0.0
    %587 = vmatprep.subr.mxu0 0.0
    %588 = vmatpush1.msra.mxu0 0.0
    %589 = vmatprep.subr.mxu0 0.0
    %590 = vmatpush1.msra.mxu0 0.0
    %591 = vmatprep.subr.mxu0 0.0
    %592 = vmatpush1.msra.mxu0 0.0
    %593 = vmatprep.subr.mxu0 0.0
    %594 = vmatpush1.msra.mxu0 0.0
    %595 = vmatprep.mubr.f32.mxu0 0.0
    %596 = vmatmul.mubr.f32.gmra.mrb[0].mxu0 %v529
    %v597 = vpop.f32.mrb[0].mxu0
    %v598 = vadd.f32 0.0, %v597
    %v599 = vpop.f32.mrb[0].mxu0
    %600 = vdwg.mxu0
    %v601 = vadd.f32 %v327, %v598
    %v602 = vxor.u32 %v601, 2147483648
    %v603 = vmul.f32 %v602, 1.442695
    %v604 = vpow.pop %v603
    %v605 = vadd.f32 %v604, 1.0
    %v606 = vrcp.pop %v605
    %v607 = vmul.f32 1.0, %v606
    %v608 = vtanh.pop %v601
    %v609 = vmul.f32 %v607, %v519
    %611 = vrot.lane.b32.xlu0 %v608, 64
    %v612 = vpop.permute.xlu0 %611
    %v614 = vmul.f32 %v607, %v612
    %616 = vrot.lane.b32.xlu0 %v614, 32
    %v617 = vpop.permute.xlu0 %616
    %v619 = vadd.f32 %v609, %v617
    %v620 = vtanh.pop %v619
    %622 = vrot.lane.b32.xlu0 %v620, 64
    %v623 = vpop.permute.xlu0 %622
    %v625 = vmul.f32 %v607, %v623
    %627 = vrot.lane.b32.xlu0 %v625, 32
    %v628 = vpop.permute.xlu0 %627
    %v629 = vsel %vm427, %v628, 0
    %631 = vmatprep.subr.mxu0 0.0
    %632 = vmatpush1.msra.mxu0 %v143
    %633 = vmatprep.subr.mxu0 0.0
    %634 = vmatpush1.msra.mxu0 %v144
    %635 = vmatprep.subr.mxu0 0.0
    %636 = vmatpush1.msra.mxu0 %v145
    %637 = vmatprep.subr.mxu0 0.0
    %638 = vmatpush1.msra.mxu0 %v146
    %639 = vmatprep.subr.mxu0 0.0
    %640 = vmatpush1.msra.mxu0 0.0
    %641 = vmatprep.subr.mxu0 0.0
    %642 = vmatpush1.msra.mxu0 0.0
    %643 = vmatprep.subr.mxu0 0.0
    %644 = vmatpush1.msra.mxu0 0.0
    %645 = vmatprep.subr.mxu0 0.0
    %646 = vmatpush1.msra.mxu0 0.0
    %647 = vmatprep.subr.mxu0 0.0
    %648 = vmatpush1.msra.mxu0 0.0
    %649 = vmatprep.subr.mxu0 0.0
    %650 = vmatpush1.msra.mxu0 0.0
    %651 = vmatprep.subr.mxu0 0.0
    %652 = vmatpush1.msra.mxu0 0.0
    %653 = vmatprep.subr.mxu0 0.0
    %654 = vmatpush1.msra.mxu0 0.0
    %655 = vmatprep.subr.mxu0 0.0
    %656 = vmatpush1.msra.mxu0 0.0
    %657 = vmatprep.subr.mxu0 0.0
    %658 = vmatpush1.msra.mxu0 0.0
    %659 = vmatprep.subr.mxu0 0.0
    %660 = vmatpush1.msra.mxu0 0.0
    %661 = vmatprep.subr.mxu0 0.0
    %662 = vmatpush1.msra.mxu0 0.0
    %663 = vmatprep.subr.mxu0 0.0
    %664 = vmatpush1.msra.mxu0 0.0
    %665 = vmatprep.subr.mxu0 0.0
    %666 = vmatpush1.msra.mxu0 0.0
    %667 = vmatprep.subr.mxu0 0.0
    %668 = vmatpush1.msra.mxu0 0.0
    %669 = vmatprep.subr.mxu0 0.0
    %670 = vmatpush1.msra.mxu0 0.0
    %671 = vmatprep.subr.mxu0 0.0
    %672 = vmatpush1.msra.mxu0 0.0
    %673 = vmatprep.subr.mxu0 0.0
    %674 = vmatpush1.msra.mxu0 0.0
    %675 = vmatprep.subr.mxu0 0.0
    %676 = vmatpush1.msra.mxu0 0.0
    %677 = vmatprep.subr.mxu0 0.0
    %678 = vmatpush1.msra.mxu0 0.0
    %679 = vmatprep.subr.mxu0 0.0
    %680 = vmatpush1.msra.mxu0 0.0
    %681 = vmatprep.subr.mxu0 0.0
    %682 = vmatpush1.msra.mxu0 0.0
    %683 = vmatprep.subr.mxu0 0.0
    %684 = vmatpush1.msra.mxu0 0.0
    %685 = vmatprep.subr.mxu0 0.0
    %686 = vmatpush1.msra.mxu0 0.0
    %687 = vmatprep.subr.mxu0 0.0
    %688 = vmatpush1.msra.mxu0 0.0
    %689 = vmatprep.subr.mxu0 0.0
    %690 = vmatpush1.msra.mxu0 0.0
    %691 = vmatprep.subr.mxu0 0.0
    %692 = vmatpush1.msra.mxu0 0.0
    %693 = vmatprep.subr.mxu0 0.0
    %694 = vmatpush1.msra.mxu0 0.0
    %695 = vmatprep.mubr.f32.mxu0 0.0
    %696 = vmatmul.mubr.f32.gmra.mrb[0].mxu0 %v629
    %v697 = vpop.f32.mrb[0].mxu0
    %v698 = vadd.f32 0.0, %v697
    %v699 = vpop.f32.mrb[0].mxu0
    %700 = vdwg.mxu0
    %v701 = vadd.f32 %v328, %v698
    %v702 = vxor.u32 %v701, 2147483648
    %v703 = vmul.f32 %v702, 1.442695
    %v704 = vpow.pop %v703
    %v705 = vadd.f32 %v704, 1.0
    %v706 = vrcp.pop %v705
    %v707 = vmul.f32 1.0, %v706
    %v708 = vtanh.pop %v701
    %v709 = vmul.f32 %v707, %v619
    %711 = vrot.lane.b32.xlu0 %v708, 64
    %v712 = vpop.permute.xlu0 %711
    %v714 = vmul.f32 %v707, %v712
    %716 = vrot.lane.b32.xlu0 %v714, 32
    %v717 = vpop.permute.xlu0 %716
    %v719 = vadd.f32 %v709, %v717
    %v720 = vtanh.pop %v719
    %722 = vrot.lane.b32.xlu0 %v720, 64
    %v723 = vpop.permute.xlu0 %722
    %v725 = vmul.f32 %v707, %v723
    %727 = vrot.lane.b32.xlu0 %v725, 32
    %v728 = vpop.permute.xlu0 %727
    %v729 = vsel %vm427, %v728, 0
    %731 = vmatprep.subr.mxu0 0.0
    %732 = vmatpush1.msra.mxu0 %v143
    %733 = vmatprep.subr.mxu0 0.0
    %734 = vmatpush1.msra.mxu0 %v144
    %735 = vmatprep.subr.mxu0 0.0
    %736 = vmatpush1.msra.mxu0 %v145
    %737 = vmatprep.subr.mxu0 0.0
    %738 = vmatpush1.msra.mxu0 %v146
    %739 = vmatprep.subr.mxu0 0.0
    %740 = vmatpush1.msra.mxu0 0.0
    %741 = vmatprep.subr.mxu0 0.0
    %742 = vmatpush1.msra.mxu0 0.0
    %743 = vmatprep.subr.mxu0 0.0
    %744 = vmatpush1.msra.mxu0 0.0
    %745 = vmatprep.subr.mxu0 0.0
    %746 = vmatpush1.msra.mxu0 0.0
    %747 = vmatprep.subr.mxu0 0.0
    %748 = vmatpush1.msra.mxu0 0.0
    %749 = vmatprep.subr.mxu0 0.0
    %750 = vmatpush1.msra.mxu0 0.0
    %751 = vmatprep.subr.mxu0 0.0
    %752 = vmatpush1.msra.mxu0 0.0
    %753 = vmatprep.subr.mxu0 0.0
    %754 = vmatpush1.msra.mxu0 0.0
    %755 = vmatprep.subr.mxu0 0.0
    %756 = vmatpush1.msra.mxu0 0.0
    %757 = vmatprep.subr.mxu0 0.0
    %758 = vmatpush1.msra.mxu0 0.0
    %759 = vmatprep.subr.mxu0 0.0
    %760 = vmatpush1.msra.mxu0 0.0
    %761 = vmatprep.subr.mxu0 0.0
    %762 = vmatpush1.msra.mxu0 0.0
    %763 = vmatprep.subr.mxu0 0.0
    %764 = vmatpush1.msra.mxu0 0.0
    %765 = vmatprep.subr.mxu0 0.0
    %766 = vmatpush1.msra.mxu0 0.0
    %767 = vmatprep.subr.mxu0 0.0
    %768 = vmatpush1.msra.mxu0 0.0
    %769 = vmatprep.subr.mxu0 0.0
    %770 = vmatpush1.msra.mxu0 0.0
    %771 = vmatprep.subr.mxu0 0.0
    %772 = vmatpush1.msra.mxu0 0.0
    %773 = vmatprep.subr.mxu0 0.0
    %774 = vmatpush1.msra.mxu0 0.0
    %775 = vmatprep.subr.mxu0 0.0
    %776 = vmatpush1.msra.mxu0 0.0
    %777 = vmatprep.subr.mxu0 0.0
    %778 = vmatpush1.msra.mxu0 0.0
    %779 = vmatprep.subr.mxu0 0.0
    %780 = vmatpush1.msra.mxu0 0.0
    %781 = vmatprep.subr.mxu0 0.0
    %782 = vmatpush1.msra.mxu0 0.0
    %783 = vmatprep.subr.mxu0 0.0
    %784 = vmatpush1.msra.mxu0 0.0
    %785 = vmatprep.subr.mxu0 0.0
    %786 = vmatpush1.msra.mxu0 0.0
    %787 = vmatprep.subr.mxu0 0.0
    %788 = vmatpush1.msra.mxu0 0.0
    %789 = vmatprep.subr.mxu0 0.0
    %790 = vmatpush1.msra.mxu0 0.0
    %791 = vmatprep.subr.mxu0 0.0
    %792 = vmatpush1.msra.mxu0 0.0
    %793 = vmatprep.subr.mxu0 0.0
    %794 = vmatpush1.msra.mxu0 0.0
    %795 = vmatprep.mubr.f32.mxu0 0.0
    %796 = vmatmul.mubr.f32.gmra.mrb[0].mxu0 %v729
    %v797 = vpop.f32.mrb[0].mxu0
    %v798 = vadd.f32 0.0, %v797
    %v799 = vpop.f32.mrb[0].mxu0
    %800 = vdwg.mxu0
    %v801 = vadd.f32 %v329, %v798
    %v802 = vxor.u32 %v801, 2147483648
    %v803 = vmul.f32 %v802, 1.442695
    %v804 = vpow.pop %v803
    %v805 = vadd.f32 %v804, 1.0
    %v806 = vrcp.pop %v805
    %v807 = vmul.f32 1.0, %v806
    %v808 = vtanh.pop %v801
    %v809 = vmul.f32 %v807, %v719
    %811 = vrot.lane.b32.xlu0 %v808, 64
    %v812 = vpop.permute.xlu0 %811
    %v814 = vmul.f32 %v807, %v812
    %816 = vrot.lane.b32.xlu0 %v814, 32
    %v817 = vpop.permute.xlu0 %816
    %v819 = vadd.f32 %v809, %v817
    %v820 = vtanh.pop %v819
    %822 = vrot.lane.b32.xlu0 %v820, 64
    %v823 = vpop.permute.xlu0 %822
    %v825 = vmul.f32 %v807, %v823
    %827 = vrot.lane.b32.xlu0 %v825, 32
    %v828 = vpop.permute.xlu0 %827
    %v829 = vsel %vm427, %v828, 0
    %831 = vmatprep.subr.mxu0 0.0
    %832 = vmatpush1.msra.mxu0 %v143
    %833 = vmatprep.subr.mxu0 0.0
    %834 = vmatpush1.msra.mxu0 %v144
    %835 = vmatprep.subr.mxu0 0.0
    %836 = vmatpush1.msra.mxu0 %v145
    %837 = vmatprep.subr.mxu0 0.0
    %838 = vmatpush1.msra.mxu0 %v146
    %839 = vmatprep.subr.mxu0 0.0
    %840 = vmatpush1.msra.mxu0 0.0
    %841 = vmatprep.subr.mxu0 0.0
    %842 = vmatpush1.msra.mxu0 0.0
    %843 = vmatprep.subr.mxu0 0.0
    %844 = vmatpush1.msra.mxu0 0.0
    %845 = vmatprep.subr.mxu0 0.0
    %846 = vmatpush1.msra.mxu0 0.0
    %847 = vmatprep.subr.mxu0 0.0
    %848 = vmatpush1.msra.mxu0 0.0
    %849 = vmatprep.subr.mxu0 0.0
    %850 = vmatpush1.msra.mxu0 0.0
    %851 = vmatprep.subr.mxu0 0.0
    %852 = vmatpush1.msra.mxu0 0.0
    %853 = vmatprep.subr.mxu0 0.0
    %854 = vmatpush1.msra.mxu0 0.0
    %855 = vmatprep.subr.mxu0 0.0
    %856 = vmatpush1.msra.mxu0 0.0
    %857 = vmatprep.subr.mxu0 0.0
    %858 = vmatpush1.msra.mxu0 0.0
    %859 = vmatprep.subr.mxu0 0.0
    %860 = vmatpush1.msra.mxu0 0.0
    %861 = vmatprep.subr.mxu0 0.0
    %862 = vmatpush1.msra.mxu0 0.0
    %863 = vmatprep.subr.mxu0 0.0
    %864 = vmatpush1.msra.mxu0 0.0
    %865 = vmatprep.subr.mxu0 0.0
    %866 = vmatpush1.msra.mxu0 0.0
    %867 = vmatprep.subr.mxu0 0.0
    %868 = vmatpush1.msra.mxu0 0.0
    %869 = vmatprep.subr.mxu0 0.0
    %870 = vmatpush1.msra.mxu0 0.0
    %871 = vmatprep.subr.mxu0 0.0
    %872 = vmatpush1.msra.mxu0 0.0
    %873 = vmatprep.subr.mxu0 0.0
    %874 = vmatpush1.msra.mxu0 0.0
    %875 = vmatprep.subr.mxu0 0.0
    %876 = vmatpush1.msra.mxu0 0.0
    %877 = vmatprep.subr.mxu0 0.0
    %878 = vmatpush1.msra.mxu0 0.0
    %879 = vmatprep.subr.mxu0 0.0
    %880 = vmatpush1.msra.mxu0 0.0
    %881 = vmatprep.subr.mxu0 0.0
    %882 = vmatpush1.msra.mxu0 0.0
    %883 = vmatprep.subr.mxu0 0.0
    %884 = vmatpush1.msra.mxu0 0.0
    %885 = vmatprep.subr.mxu0 0.0
    %886 = vmatpush1.msra.mxu0 0.0
    %887 = vmatprep.subr.mxu0 0.0
    %888 = vmatpush1.msra.mxu0 0.0
    %889 = vmatprep.subr.mxu0 0.0
    %890 = vmatpush1.msra.mxu0 0.0
    %891 = vmatprep.subr.mxu0 0.0
    %892 = vmatpush1.msra.mxu0 0.0
    %893 = vmatprep.subr.mxu0 0.0
    %894 = vmatpush1.msra.mxu0 0.0
    %895 = vmatprep.mubr.f32.mxu0 0.0
    %896 = vmatmul.mubr.f32.gmra.mrb[0].mxu0 %v829
    %v897 = vpop.f32.mrb[0].mxu0
    %v898 = vadd.f32 0.0, %v897
    %v899 = vpop.f32.mrb[0].mxu0
    %900 = vdwg.mxu0
    %v901 = vadd.f32 %v330, %v898
    %v902 = vxor.u32 %v901, 2147483648
    %v903 = vmul.f32 %v902, 1.442695
    %v904 = vpow.pop %v903
    %v905 = vadd.f32 %v904, 1.0
    %v906 = vrcp.pop %v905
    %v907 = vmul.f32 1.0, %v906
    %v908 = vtanh.pop %v901
    %v909 = vmul.f32 %v907, %v819
    %911 = vrot.lane.b32.xlu0 %v908, 64
    %v912 = vpop.permute.xlu0 %911
    %v914 = vmul.f32 %v907, %v912
    %916 = vrot.lane.b32.xlu0 %v914, 32
    %v917 = vpop.permute.xlu0 %916
    %v919 = vadd.f32 %v909, %v917
    %v920 = vtanh.pop %v919
    %922 = vrot.lane.b32.xlu0 %v920, 64
    %v923 = vpop.permute.xlu0 %922
    %v925 = vmul.f32 %v907, %v923
    %927 = vrot.lane.b32.xlu0 %v925, 32
    %v928 = vpop.permute.xlu0 %927
    %v929 = vsel %vm427, %v928, 0
    %931 = vmatprep.subr.mxu0 0.0
    %932 = vmatpush1.msra.mxu0 %v143
    %933 = vmatprep.subr.mxu0 0.0
    %934 = vmatpush1.msra.mxu0 %v144
    %935 = vmatprep.subr.mxu0 0.0
    %936 = vmatpush1.msra.mxu0 %v145
    %937 = vmatprep.subr.mxu0 0.0
    %938 = vmatpush1.msra.mxu0 %v146
    %939 = vmatprep.subr.mxu0 0.0
    %940 = vmatpush1.msra.mxu0 0.0
    %941 = vmatprep.subr.mxu0 0.0
    %942 = vmatpush1.msra.mxu0 0.0
    %943 = vmatprep.subr.mxu0 0.0
    %944 = vmatpush1.msra.mxu0 0.0
    %945 = vmatprep.subr.mxu0 0.0
    %946 = vmatpush1.msra.mxu0 0.0
    %947 = vmatprep.subr.mxu0 0.0
    %948 = vmatpush1.msra.mxu0 0.0
    %949 = vmatprep.subr.mxu0 0.0
    %950 = vmatpush1.msra.mxu0 0.0
    %951 = vmatprep.subr.mxu0 0.0
    %952 = vmatpush1.msra.mxu0 0.0
    %953 = vmatprep.subr.mxu0 0.0
    %954 = vmatpush1.msra.mxu0 0.0
    %955 = vmatprep.subr.mxu0 0.0
    %956 = vmatpush1.msra.mxu0 0.0
    %957 = vmatprep.subr.mxu0 0.0
    %958 = vmatpush1.msra.mxu0 0.0
    %959 = vmatprep.subr.mxu0 0.0
    %960 = vmatpush1.msra.mxu0 0.0
    %961 = vmatprep.subr.mxu0 0.0
    %962 = vmatpush1.msra.mxu0 0.0
    %963 = vmatprep.subr.mxu0 0.0
    %964 = vmatpush1.msra.mxu0 0.0
    %965 = vmatprep.subr.mxu0 0.0
    %966 = vmatpush1.msra.mxu0 0.0
    %967 = vmatprep.subr.mxu0 0.0
    %968 = vmatpush1.msra.mxu0 0.0
    %969 = vmatprep.subr.mxu0 0.0
    %970 = vmatpush1.msra.mxu0 0.0
    %971 = vmatprep.subr.mxu0 0.0
    %972 = vmatpush1.msra.mxu0 0.0
    %973 = vmatprep.subr.mxu0 0.0
    %974 = vmatpush1.msra.mxu0 0.0
    %975 = vmatprep.subr.mxu0 0.0
    %976 = vmatpush1.msra.mxu0 0.0
    %977 = vmatprep.subr.mxu0 0.0
    %978 = vmatpush1.msra.mxu0 0.0
    %979 = vmatprep.subr.mxu0 0.0
    %980 = vmatpush1.msra.mxu0 0.0
    %981 = vmatprep.subr.mxu0 0.0
    %982 = vmatpush1.msra.mxu0 0.0
    %983 = vmatprep.subr.mxu0 0.0
    %984 = vmatpush1.msra.mxu0 0.0
    %985 = vmatprep.subr.mxu0 0.0
    %986 = vmatpush1.msra.mxu0 0.0
    %987 = vmatprep.subr.mxu0 0.0
    %988 = vmatpush1.msra.mxu0 0.0
    %989 = vmatprep.subr.mxu0 0.0
    %990 = vmatpush1.msra.mxu0 0.0
    %991 = vmatprep.subr.mxu0 0.0
    %992 = vmatpush1.msra.mxu0 0.0
    %993 = vmatprep.subr.mxu0 0.0
    %994 = vmatpush1.msra.mxu0 0.0
    %995 = vmatprep.mubr.f32.mxu0 0.0
    %996 = vmatmul.mubr.f32.gmra.mrb[0].mxu0 %v929
    %v997 = vpop.f32.mrb[0].mxu0
    %v998 = vadd.f32 0.0, %v997
    %v999 = vpop.f32.mrb[0].mxu0
    %1000 = vdwg.mxu0
    %v1001 = vadd.f32 %v331, %v998
    %v1002 = vxor.u32 %v1001, 2147483648
    %v1003 = vmul.f32 %v1002, 1.442695
    %v1004 = vpow.pop %v1003
    %v1005 = vadd.f32 %v1004, 1.0
    %v1006 = vrcp.pop %v1005
    %v1007 = vmul.f32 1.0, %v1006
    %v1008 = vtanh.pop %v1001
    %v1009 = vmul.f32 %v1007, %v919
    %1011 = vrot.lane.b32.xlu0 %v1008, 64
    %v1012 = vpop.permute.xlu0 %1011
    %v1014 = vmul.f32 %v1007, %v1012
    %1016 = vrot.lane.b32.xlu0 %v1014, 32
    %v1017 = vpop.permute.xlu0 %1016
    %v1019 = vadd.f32 %v1009, %v1017
    %v1020 = vtanh.pop %v1019
    %1022 = vrot.lane.b32.xlu0 %v1020, 64
    %v1023 = vpop.permute.xlu0 %1022
    %v1025 = vmul.f32 %v1007, %v1023
    %1027 = vrot.lane.b32.xlu0 %v1025, 32
    %v1028 = vpop.permute.xlu0 %1027
    %v1029 = vsel %vm427, %v1028, 0
    %1031 = vmatprep.subr.mxu0 0.0
    %1032 = vmatpush1.msra.mxu0 %v148
    %1033 = vmatprep.subr.mxu0 0.0
    %1034 = vmatpush1.msra.mxu0 %v149
    %1035 = vmatprep.subr.mxu0 0.0
    %1036 = vmatpush1.msra.mxu0 %v150
    %1037 = vmatprep.subr.mxu0 0.0
    %1038 = vmatpush1.msra.mxu0 %v151
    %1039 = vmatprep.subr.mxu0 0.0
    %1040 = vmatpush1.msra.mxu0 0.0
    %1041 = vmatprep.subr.mxu0 0.0
    %1042 = vmatpush1.msra.mxu0 0.0
    %1043 = vmatprep.subr.mxu0 0.0
    %1044 = vmatpush1.msra.mxu0 0.0
    %1045 = vmatprep.subr.mxu0 0.0
    %1046 = vmatpush1.msra.mxu0 0.0
    %1047 = vmatprep.subr.mxu0 0.0
    %1048 = vmatpush1.msra.mxu0 0.0
    %1049 = vmatprep.subr.mxu0 0.0
    %1050 = vmatpush1.msra.mxu0 0.0
    %1051 = vmatprep.subr.mxu0 0.0
    %1052 = vmatpush1.msra.mxu0 0.0
    %1053 = vmatprep.subr.mxu0 0.0
    %1054 = vmatpush1.msra.mxu0 0.0
    %1055 = vmatprep.subr.mxu0 0.0
    %1056 = vmatpush1.msra.mxu0 0.0
    %1057 = vmatprep.subr.mxu0 0.0
    %1058 = vmatpush1.msra.mxu0 0.0
    %1059 = vmatprep.subr.mxu0 0.0
    %1060 = vmatpush1.msra.mxu0 0.0
    %1061 = vmatprep.subr.mxu0 0.0
    %1062 = vmatpush1.msra.mxu0 0.0
    %1063 = vmatprep.subr.mxu0 0.0
    %1064 = vmatpush1.msra.mxu0 0.0
    %1065 = vmatprep.subr.mxu0 0.0
    %1066 = vmatpush1.msra.mxu0 0.0
    %1067 = vmatprep.subr.mxu0 0.0
    %1068 = vmatpush1.msra.mxu0 0.0
    %1069 = vmatprep.subr.mxu0 0.0
    %1070 = vmatpush1.msra.mxu0 0.0
    %1071 = vmatprep.subr.mxu0 0.0
    %1072 = vmatpush1.msra.mxu0 0.0
    %1073 = vmatprep.subr.mxu0 0.0
    %1074 = vmatpush1.msra.mxu0 0.0
    %1075 = vmatprep.subr.mxu0 0.0
    %1076 = vmatpush1.msra.mxu0 0.0
    %1077 = vmatprep.subr.mxu0 0.0
    %1078 = vmatpush1.msra.mxu0 0.0
    %1079 = vmatprep.subr.mxu0 0.0
    %1080 = vmatpush1.msra.mxu0 0.0
    %1081 = vmatprep.subr.mxu0 0.0
    %1082 = vmatpush1.msra.mxu0 0.0
    %1083 = vmatprep.subr.mxu0 0.0
    %1084 = vmatpush1.msra.mxu0 0.0
    %1085 = vmatprep.subr.mxu0 0.0
    %1086 = vmatpush1.msra.mxu0 0.0
    %1087 = vmatprep.subr.mxu0 0.0
    %1088 = vmatpush1.msra.mxu0 0.0
    %1089 = vmatprep.subr.mxu0 0.0
    %1090 = vmatpush1.msra.mxu0 0.0
    %1091 = vmatprep.subr.mxu0 0.0
    %1092 = vmatpush1.msra.mxu0 0.0
    %1093 = vmatprep.subr.mxu0 0.0
    %1094 = vmatpush1.msra.mxu0 0.0
    %1095 = vmatprep.mubr.f32.mxu0 0.0
    %1096 = vmatmul.mubr.f32.gmra.mrb[0].mxu0 %v1029
    %v1097 = vpop.f32.mrb[0].mxu0
    %v1098 = vadd.f32 %v424, %v1097
    %v1099 = vpop.f32.mrb[0].mxu0
    %1100 = vdwg.mxu0
    %1101 = vrot.lane.b32.xlu0 %v156, 96
    %v1102 = vpop.permute.xlu0 %1101
    %v1104 = vmul.f32 %v1098, %v1102
    %v1105 = vsel %vm427, %v1104, 0.0
    %1106 = vadd.xlane.f32.xlu0 %v1105
    %v1107 = vpop.xlane.xlu0 %1106
    %v1108 = vadd.f32 %v1107, %v156
    %1110 = vrot.lane.b32.xlu0 %v1108, 46
    %v1111 = vpop.permute.xlu0 %1110
    %vm1113 = vcmask 7168
    %1114 = vst.msk [vmem:[%s4] sm:$0xff] %vm1113, %v1111
    // Predicated region
    $region34: #{tpu_custom_call.1} parent=1 // pred_check
      _
    $region35: #{tpu_custom_call.1} parent=1 // pred_check_branch
      %1116 = sbr.rel (0) target = $region37
    $region36: #{tpu_custom_call.1} parent=1 // pred_region
      _
    $region37: #{tpu_custom_call.1} parent=1 // pred_fallthru
      _
    // Predicated region
    $region38: #{tpu_custom_call.1} parent=1 // pred_check
      _
    $region39: #{tpu_custom_call.1} parent=1 // pred_check_branch
      %1118 = sbr.rel (0) target = $region41
    $region40: #{tpu_custom_call.1} parent=1 // pred_region
      _
    $region41: #{tpu_custom_call.1} parent=1 // pred_fallthru
      _
    %1119 = vsyncpa [#allocation3], 1
    %1120 = vsyncpa [#allocation5], 1
    %1121 = vsyncpa [#allocation8], 1

</llo_original>
